<compile_context>
chip_gen: v7x
topology: tpu7x:2x2x1
jax: 0.10.0
libtpu: 0.0.40
codegen_flags: <defaults>
</compile_context>

<pallas_src>
import functools
import math

import jax
import jax.numpy as jnp
from jax import lax
from jax.experimental import pallas as pl
from jax.experimental.pallas import tpu as pltpu

# ----------------------------------------------------------------------------
# Global config
# ----------------------------------------------------------------------------
WEIGHT_DTYPE = jnp.bfloat16      # matmul operands (MXU-native bf16)
ACT_DTYPE = jnp.bfloat16         # activations between kernels (halves HBM traffic)
LN_EPS = 1e-12

# Tile targets (fall back to the full dim when it is smaller / does not divide).
TM, TN, TK = 512, 512, 1024      # matmul tiles
TQ, TKV = 256, 256               # flash-attention q / kv tiles
LN_TM = 1024                     # row tile for the standalone LayerNorm


def _vmem_limit_bytes():
    """Per-generation VMEM budget: half of physical VMEM, capped at 64 MiB."""
    cap = 128 * 1024 * 1024
    try:
        info = pltpu.get_tpu_info()
        cap = int(getattr(info, "vmem_capacity_bytes", cap))
    except Exception:
        pass
    return int(min(64 * 1024 * 1024, cap // 2))


VMEM_LIMIT = _vmem_limit_bytes()


def _tile(dim, target, align):
    """Largest tile <= target that divides `dim` and is `align`-aligned; else full dim."""
    if dim <= target:
        return dim
    t = (target // align) * align
    while t >= align:
        if dim % t == 0:
            return t
        t -= align
    return dim


# ----------------------------------------------------------------------------
# Pallas kernels
# ----------------------------------------------------------------------------

def _linear_kernel(x_ref, w_ref, b_ref, o_ref, acc_ref, *, act):
    """One (tm, tn) tile of act(x @ w + b) with K-axis accumulation in f32."""
    @pl.when(pl.program_id(2) == 0)
    def _():
        acc_ref[...] = jnp.zeros_like(acc_ref)

    acc_ref[...] += jnp.dot(x_ref[...], w_ref[...],
                            preferred_element_type=jnp.float32)

    @pl.when(pl.program_id(2) == pl.num_programs(2) - 1)
    def _():
        y = acc_ref[...] + b_ref[...].astype(jnp.float32)
        if act == "gelu":
            # TODO(synk): HF bert-base uses exact erf GELU; tanh approximation
            # kept for robust Mosaic lowering (small numerical drift).
            y = jax.nn.gelu(y, approximate=True)
        elif act == "tanh":
            y = jnp.tanh(y)
        o_ref[...] = y.astype(o_ref.dtype)


def linear(x, w, b, act="none", out_dtype=None):
    """Tiled dense layer: x:[M,K] @ w:[K,N] + b:[1,N] -> [M,N]."""
    M, K = x.shape
    N = w.shape[1]
    out_dtype = out_dtype or x.dtype
    tm = _tile(M, TM, 16)                      # 16-row align for bf16 outputs
    if N <= 768:
        tn = N
    elif N % 768 == 0:
        tn = 768
    else:
        tn = _tile(N, TN, 128)
    tk = _tile(K, TK, 128)
    grid = (M // tm, N // tn, K // tk)
    kernel = functools.partial(_linear_kernel, act=act)
    flops = 2 * M * N * K
    trans = M * N if act in ("gelu", "tanh") else 0
    bytes_accessed = int((M * K + K * N) * x.dtype.itemsize + N * 4
                         + M * N * jnp.dtype(out_dtype).itemsize)
    return pl.pallas_call(
        kernel,
        out_shape=jax.ShapeDtypeStruct((M, N), out_dtype),
        grid=grid,
        in_specs=[
            pl.BlockSpec((tm, tk), lambda i, j, k: (i, k)),
            pl.BlockSpec((tk, tn), lambda i, j, k: (k, j)),
            pl.BlockSpec((1, tn), lambda i, j, k: (0, j)),
        ],
        out_specs=pl.BlockSpec((tm, tn), lambda i, j, k: (i, j)),
        scratch_shapes=[pltpu.VMEM((tm, tn), jnp.float32)],
        compiler_params=pltpu.CompilerParams(
            dimension_semantics=("parallel", "parallel", "arbitrary"),
            vmem_limit_bytes=VMEM_LIMIT),
        cost_estimate=pl.CostEstimate(flops=int(flops), transcendentals=int(trans),
                                      bytes_accessed=bytes_accessed),
    )(x, w, b)


def _linear_res_ln_kernel(x_ref, w_ref, b_ref, r_ref, g_ref, bb_ref,
                          o_ref, acc_ref, *, eps):
    """o = LayerNorm(x @ w + b + residual) * g + beta, fused in the matmul epilogue."""
    # k == 0: seed the accumulator with residual + bias so that add overlaps
    # with the first K-step's matmul and the epilogue is a single pass.
    @pl.when(pl.program_id(1) == 0)
    def _():
        acc_ref[...] = (r_ref[...].astype(jnp.float32)
                        + b_ref[...].astype(jnp.float32))

    acc_ref[...] += jnp.dot(x_ref[...], w_ref[...],
                            preferred_element_type=jnp.float32)

    @pl.when(pl.program_id(1) == pl.num_programs(1) - 1)
    def _():
        y = acc_ref[...]
        mean = jnp.mean(y, axis=-1, keepdims=True)
        mean_sq = jnp.mean(y * y, axis=-1, keepdims=True)
        inv = lax.rsqrt(mean_sq - mean * mean + eps)
        o_ref[...] = ((y - mean) * inv * g_ref[...].astype(jnp.float32)
                      + bb_ref[...].astype(jnp.float32)).astype(o_ref.dtype)


def linear_residual_layernorm(x, w, b, residual, gamma, beta,
                              eps=LN_EPS, out_dtype=None):
    """Fused x@w + b + residual -> LayerNorm.  N (= hidden) is kept un-tiled
    so the row-wise LN statistics are computed over the full feature dim."""
    M, K = x.shape
    N = w.shape[1]
    out_dtype = out_dtype or residual.dtype
    tm = _tile(M, TM, 16)
    tk = _tile(K, TK, 128)
    grid = (M // tm, K // tk)
    kernel = functools.partial(_linear_res_ln_kernel, eps=eps)
    flops = 2 * M * N * K + 10 * M * N
    bytes_accessed = int((M * K + K * N + M * N) * x.dtype.itemsize
                         + 3 * N * 4 + M * N * jnp.dtype(out_dtype).itemsize)
    return pl.pallas_call(
        kernel,
        out_shape=jax.ShapeDtypeStruct((M, N), out_dtype),
        grid=grid,
        in_specs=[
            pl.BlockSpec((tm, tk), lambda i, k: (i, k)),
            pl.BlockSpec((tk, N), lambda i, k: (k, 0)),
            pl.BlockSpec((1, N), lambda i, k: (0, 0)),
            pl.BlockSpec((tm, N), lambda i, k: (i, 0)),   # residual
            pl.BlockSpec((1, N), lambda i, k: (0, 0)),    # gamma
            pl.BlockSpec((1, N), lambda i, k: (0, 0)),    # beta
        ],
        out_specs=pl.BlockSpec((tm, N), lambda i, k: (i, 0)),
        scratch_shapes=[pltpu.VMEM((tm, N), jnp.float32)],
        compiler_params=pltpu.CompilerParams(
            dimension_semantics=("parallel", "arbitrary"),
            vmem_limit_bytes=VMEM_LIMIT),
        cost_estimate=pl.CostEstimate(flops=int(flops), transcendentals=int(M),
                                      bytes_accessed=bytes_accessed),
    )(x, w, b, residual, gamma, beta)


def _layernorm_kernel(x_ref, g_ref, b_ref, o_ref, *, eps):
    """Row-tiled LayerNorm (no residual): used for the embedding LN."""
    x = x_ref[...].astype(jnp.float32)
    mean = jnp.mean(x, axis=-1, keepdims=True)
    mean_sq = jnp.mean(x * x, axis=-1, keepdims=True)
    inv = lax.rsqrt(mean_sq - mean * mean + eps)
    o_ref[...] = ((x - mean) * inv * g_ref[...].astype(jnp.float32)
                  + b_ref[...].astype(jnp.float32)).astype(o_ref.dtype)


def layernorm(x, gamma, beta, eps=LN_EPS, out_dtype=None):
    M, H = x.shape
    out_dtype = out_dtype or x.dtype
    tm = _tile(M, LN_TM, 16)
    kernel = functools.partial(_layernorm_kernel, eps=eps)
    return pl.pallas_call(
        kernel,
        out_shape=jax.ShapeDtypeStruct((M, H), out_dtype),
        grid=(M // tm,),
        in_specs=[
            pl.BlockSpec((tm, H), lambda i: (i, 0)),
            pl.BlockSpec((1, H), lambda i: (0, 0)),
            pl.BlockSpec((1, H), lambda i: (0, 0)),
        ],
        out_specs=pl.BlockSpec((tm, H), lambda i: (i, 0)),
        compiler_params=pltpu.CompilerParams(
            dimension_semantics=("parallel",),
            vmem_limit_bytes=VMEM_LIMIT),
    )(x, gamma, beta)


def _flash_attn_kernel(q_ref, k_ref, v_ref, bias_ref, o_ref,
                       m_sc, l_sc, acc_sc, *, group_heads, head_dim, tkv, kv_blocks):
    """Flash-attention tile over G grouped heads; online softmax over kv tiles.

    q/k/v refs are (tq|tkv, G*dh) column slices of the fused [B*S, 3H] qkv
    activation; the output is the merged (tq, G*dh) context slab (lane-dense).
    """
    ki = pl.program_id(3)

    @pl.when(ki == 0)
    def _():
        m_sc[...] = jnp.full(m_sc.shape, -1e30, dtype=jnp.float32)
        l_sc[...] = jnp.zeros_like(l_sc)
        acc_sc[...] = jnp.zeros_like(acc_sc)

    # Pad-mask row for this batch stays resident for the whole (h, qi, ki)
    # sweep; slice the current kv window in-kernel (no per-step sub-KB DMA).
    if kv_blocks == 1:
        bias = bias_ref[0].astype(jnp.float32)                          # (1, tkv)
    else:
        start = pl.multiple_of(ki * tkv, tkv)                           # 128-aligned
        bias = bias_ref[0, :, pl.ds(start, tkv)].astype(jnp.float32)    # (1, tkv)

    for g in range(group_heads):               # static unroll over grouped heads
        sl = slice(g * head_dim, (g + 1) * head_dim)
        q = q_ref[:, sl]                       # (tq, dh) bf16, pre-scaled by 1/sqrt(dh)
        k = k_ref[:, sl]                       # (tkv, dh)
        v = v_ref[:, sl]                       # (tkv, dh)

        s = lax.dot_general(q, k, (((1,), (1,)), ((), ())),
                            preferred_element_type=jnp.float32)          # (tq, tkv)
        s = s + bias

        m_prev = m_sc[g]                                                 # (tq, 1)
        m_new = jnp.maximum(m_prev, jnp.max(s, axis=-1, keepdims=True))
        alpha = jnp.exp(m_prev - m_new)
        p = jnp.exp(s - m_new)
        l_sc[g] = alpha * l_sc[g] + jnp.sum(p, axis=-1, keepdims=True)
        acc_sc[g] = alpha * acc_sc[g] + jnp.dot(
            p.astype(v.dtype), v, preferred_element_type=jnp.float32)
        m_sc[g] = m_new

    @pl.when(ki == pl.num_programs(3) - 1)
    def _():
        # One lane-dense (tq, G*dh) store instead of G masked dh-wide stores.
        out = jnp.concatenate(
            [acc_sc[g] / l_sc[g] for g in range(group_heads)], axis=-1)
        o_ref[...] = out.astype(o_ref.dtype)


def _choose_head_group(num_heads, head_dim):
    """Smallest head-group size G (dividing nH) with G*dh a multiple of 128."""
    for g in range(1, num_heads + 1):
        if num_heads % g == 0 and (g * head_dim) % 128 == 0:
            return g
    return num_heads        # fall back: one group spanning the full Q width


def flash_attention(qkv, mask_bias, *, num_heads, head_dim):
    """qkv: [B*S, 3H] (Q columns pre-scaled by 1/sqrt(dh)); mask_bias: [B,1,S] f32.
    Returns the merged per-head context [B*S, H] — the head split/merge lives
    entirely in the BlockSpec index_maps (no XLA transposes)."""
    B = mask_bias.shape[0]
    S = mask_bias.shape[2]
    H = num_heads * head_dim
    assert qkv.shape == (B * S, 3 * H)

    G = _choose_head_group(num_heads, head_dim)
    gdh = G * head_dim
    hg = num_heads // G                      # number of head groups

    tq = _tile(S, TQ, 16)
    tkv = _tile(S, TKV, 128)
    q_blocks, kv_blocks = S // tq, S // tkv
    grid = (B, hg, q_blocks, kv_blocks)

    kernel = functools.partial(_flash_attn_kernel, group_heads=G,
                               head_dim=head_dim, tkv=tkv, kv_blocks=kv_blocks)

    flops = 4 * B * num_heads * S * S * head_dim
    bytes_accessed = int(4 * B * S * H * qkv.dtype.itemsize + B * S * 4)

    return pl.pallas_call(
        kernel,
        out_shape=jax.ShapeDtypeStruct((B * S, H), qkv.dtype),
        grid=grid,
        in_specs=[
            # Q / K / V are column slices of the fused qkv activation.
            pl.BlockSpec((tq, gdh),
                         lambda b, h, qi, ki: (b * q_blocks + qi, h)),
            pl.BlockSpec((tkv, gdh),
                         lambda b, h, qi, ki: (b * kv_blocks + ki, hg + h)),
            pl.BlockSpec((tkv, gdh),
                         lambda b, h, qi, ki: (b * kv_blocks + ki, 2 * hg + h)),
            # Full pad-mask row per batch (resident across h/qi/ki).
            pl.BlockSpec((1, 1, S), lambda b, h, qi, ki: (b, 0, 0)),
        ],
        out_specs=pl.BlockSpec((tq, gdh),
                               lambda b, h, qi, ki: (b * q_blocks + qi, h)),
        scratch_shapes=[
            pltpu.VMEM((G, tq, 1), jnp.float32),        # running max   m
            pltpu.VMEM((G, tq, 1), jnp.float32),        # running denom l
            pltpu.VMEM((G, tq, head_dim), jnp.float32), # output accumulator
        ],
        compiler_params=pltpu.CompilerParams(
            dimension_semantics=("parallel", "parallel", "parallel", "arbitrary"),
            vmem_limit_bytes=VMEM_LIMIT),
        cost_estimate=pl.CostEstimate(flops=int(flops),
                                      transcendentals=int(B * num_heads * S * S),
                                      bytes_accessed=bytes_accessed),
    )(qkv, qkv, qkv, mask_bias)


# ----------------------------------------------------------------------------
# Model (glue around the kernels)
# ----------------------------------------------------------------------------

def bert_encode(params, input_ids, attention_mask):
    """Mini BERT encoder; returns the tanh-pooled [CLS] output [B, H]."""
    B, S = input_ids.shape
    H = params["word_emb"].shape[1]
    nH = params["num_heads"]
    dh = H // nH

    # Embedding gathers / adds are XLA glue; the LayerNorm runs in Pallas.
    x = params["word_emb"][input_ids]                        # [B, S, H]
    x = x + params["pos_emb"][:S][None, :, :]
    x = x + params["type_emb"][0][None, None, :]             # token_type_ids == 0
    h = layernorm(x.reshape(B * S, H), params["emb_ln_g"], params["emb_ln_b"])

    # Additive pad mask (0 for real tokens, -1e9 for padding), built once.
    mask_bias = ((1.0 - attention_mask.astype(jnp.float32)) * (-1e9)
                 ).reshape(B, 1, S)

    for layer in params["layers"]:
        # Fused Q/K/V projection: one Pallas matmul with [H, 3H] weights
        # (Q-part pre-scaled by 1/sqrt(dh) at parameter-build time).
        qkv = linear(h, layer["qkv_w"], layer["qkv_b"])       # [B*S, 3H]

        # Flash attention directly on the flat qkv — head split/merge is done
        # by the attention BlockSpecs; output is already [B*S, H].
        ctx = flash_attention(qkv, mask_bias, num_heads=nH, head_dim=dh)

        # o-projection fused with bias + residual + LayerNorm.
        h = linear_residual_layernorm(ctx, layer["o_w"], layer["o_b"],
                                      h, layer["ln1_g"], layer["ln1_b"])

        # FFN: up-projection with in-kernel GELU, down-projection fused with
        # bias + residual + LayerNorm.
        ffn = linear(h, layer["i_w"], layer["i_b"], act="gelu")
        h = linear_residual_layernorm(ffn, layer["d_w"], layer["d_b"],
                                      h, layer["ln2_g"], layer["ln2_b"])

    cls = h.reshape(B, S, H)[:, 0, :]                         # [B, H]
    pooled = linear(cls, params["pool_w"], params["pool_b"], act="tanh")
    return pooled


def predict_sentiment(params, input_ids, attention_mask):
    out = bert_encode(params, input_ids, attention_mask)      # dropout = identity
    # Tiny GEMV head (N = num_labels < 128 lanes): plain XLA — a dedicated
    # pallas_call would be pure dispatch overhead + masked stores.
    return out.astype(jnp.float32) @ params["sent_w"] + params["sent_b"]


def predict_paraphrase(params, ids1, mask1, ids2, mask2):
    out1 = bert_encode(params, ids1, mask1)
    out2 = bert_encode(params, ids2, mask2)
    out = jnp.concatenate([out1, out2], axis=1).astype(jnp.float32)   # [B, 2H]
    return out @ params["para_w"] + params["para_b"]                  # [B, 1]


def predict_similarity(params, ids1, mask1, ids2, mask2):
    out1 = bert_encode(params, ids1, mask1)
    out2 = bert_encode(params, ids2, mask2)
    out = jnp.concatenate([out1, out2], axis=1).astype(jnp.float32)
    return out @ params["sim_w"] + params["sim_b"]                    # [B, 1]


# ----------------------------------------------------------------------------
# Deterministic parameter init (synthetic stand-in for 'bert-base-uncased')
# ----------------------------------------------------------------------------

def init_params(key, *, vocab=128, max_pos=16, type_vocab=2,
                H=128, nH=2, I=512, L=2, num_labels=5):
    counter = [0]

    def nk():
        counter[0] += 1
        return jax.random.fold_in(key, counter[0])

    def w_init(shape, scale=0.02):
        return jax.random.normal(nk(), shape, jnp.float32) * scale

    def dense(kin, kout):
        return w_init((kin, kout)), jnp.zeros((1, kout), jnp.float32)

    params = {
        "num_heads": nH,
        "word_emb": w_init((vocab, H)).astype(ACT_DTYPE),
        "pos_emb": w_init((max_pos, H)).astype(ACT_DTYPE),
        "type_emb": w_init((type_vocab, H)).astype(ACT_DTYPE),
        "emb_ln_g": jnp.ones((1, H), jnp.float32),
        "emb_ln_b": jnp.zeros((1, H), jnp.float32),
        "layers": [],
    }
    dh = H // nH
    q_scale = 1.0 / math.sqrt(dh)
    for _ in range(L):
        qw, qb = dense(H, H)
        kw, kb = dense(H, H)
        vw, vb = dense(H, H)
        ow, ob = dense(H, H)
        iw, ib = dense(H, I)
        dw, db = dense(I, H)
        params["layers"].append({
            # Q/K/V fused into one [H, 3H] matmul; softmax 1/sqrt(dh) scale is
            # folded into the Q weights/bias (zero runtime cost).
            "qkv_w": jnp.concatenate([qw * q_scale, kw, vw], axis=1
                                     ).astype(WEIGHT_DTYPE),
            "qkv_b": jnp.concatenate([qb * q_scale, kb, vb], axis=1),
            "o_w": ow.astype(WEIGHT_DTYPE), "o_b": ob,
            "ln1_g": jnp.ones((1, H), jnp.float32),
            "ln1_b": jnp.zeros((1, H), jnp.float32),
            "i_w": iw.astype(WEIGHT_DTYPE), "i_b": ib,
            "d_w": dw.astype(WEIGHT_DTYPE), "d_b": db,
            "ln2_g": jnp.ones((1, H), jnp.float32),
            "ln2_b": jnp.zeros((1, H), jnp.float32),
        })
    pw, pb = dense(H, H)
    params["pool_w"], params["pool_b"] = pw.astype(WEIGHT_DTYPE), pb
    params["sent_w"], params["sent_b"] = dense(H, num_labels)   # f32, plain-jnp head
    params["para_w"], params["para_b"] = dense(2 * H, 1)
    params["sim_w"], params["sim_b"] = dense(2 * H, 1)
    return params


# ----------------------------------------------------------------------------
# Main
# ----------------------------------------------------------------------------

if __name__ == "__main__":
    key = jax.random.PRNGKey(0)
    pkey, dkey = jax.random.split(key)

    # Small, lane-friendly test shapes: dh = 64 (bert-base head width), G = 2
    # heads per attention step -> 128-lane-dense attention blocks.
    B, S, H, NH, I, L, NUM_LABELS, VOCAB = 2, 8, 128, 2, 512, 2, 5, 128
    params = init_params(pkey, vocab=VOCAB, max_pos=S, H=H, nH=NH, I=I,
                         L=L, num_labels=NUM_LABELS)

    k1, k2 = jax.random.split(dkey)
    ids1 = jax.random.randint(k1, (B, S), 0, VOCAB, dtype=jnp.int32)
    ids2 = jax.random.randint(k2, (B, S), 0, VOCAB, dtype=jnp.int32)
    mask1 = jnp.ones((B, S), jnp.int32).at[:, 6:].set(0)   # last 2 tokens padded
    mask2 = jnp.ones((B, S), jnp.int32)

    sent = predict_sentiment(params, ids1, mask1)
    para = predict_paraphrase(params, ids1, mask1, ids2, mask2)
    sim = predict_similarity(params, ids1, mask1, ids2, mask2)
    jax.block_until_ready((sent, para, sim))

    assert sent.shape == (B, NUM_LABELS)
    assert para.shape == (B, 1)
    assert sim.shape == (B, 1)
    assert all(bool(jnp.all(jnp.isfinite(t))) for t in (sent, para, sim))
    print("KERNEL_OK")
</pallas_src>

<mosaic_0001>
module attributes {stable_mosaic.version = 11 : i64} {
  func.func @_layernorm_kernel(%arg0: i32, %arg1: memref<16x128xbf16, #tpu.memory_space<vmem>>, %arg2: memref<1x128xf32, #tpu.memory_space<vmem>>, %arg3: memref<1x128xf32, #tpu.memory_space<vmem>>, %arg4: memref<16x128xbf16, #tpu.memory_space<vmem>>) attributes {dimension_semantics = [#tpu.dimension_semantics<parallel>], iteration_bounds = array<i64: 1>, scalar_prefetch = 0 : i64, scratch_operands = 0 : i64, tpu.core_type = #tpu.core_type<tc>, window_params = [{transform_indices = @transform_0, window_bounds = array<i64: 16, 128>}, {pipeline_mode = #tpu.pipeline_mode<synchronous>, transform_indices = @transform_1, window_bounds = array<i64: 1, 128>}, {pipeline_mode = #tpu.pipeline_mode<synchronous>, transform_indices = @transform_2, window_bounds = array<i64: 1, 128>}, {transform_indices = @transform_3, window_bounds = array<i64: 16, 128>}]} {
    %c0 = arith.constant 0 : index
    %c0_0 = arith.constant 0 : index
    %0 = vector.load %arg1[%c0, %c0_0] : memref<16x128xbf16, #tpu.memory_space<vmem>>, vector<16x128xbf16>
    %1 = arith.extf %0 : vector<16x128xbf16> to vector<16x128xf32>
    %cst = arith.constant dense<0.000000e+00> : vector<16xf32>
    %2 = vector.multi_reduction <add>, %1, %cst [1] : vector<16x128xf32> to vector<16xf32>
    %3 = vector.shape_cast %2 : vector<16xf32> to vector<16x1xf32>
    %cst_1 = arith.constant 1.280000e+02 : f32
    %4 = vector.broadcast %cst_1 : f32 to vector<16x1xf32>
    %5 = arith.divf %3, %4 : vector<16x1xf32>
    %6 = arith.mulf %1, %1 : vector<16x128xf32>
    %cst_2 = arith.constant dense<0.000000e+00> : vector<16xf32>
    %7 = vector.multi_reduction <add>, %6, %cst_2 [1] : vector<16x128xf32> to vector<16xf32>
    %8 = vector.shape_cast %7 : vector<16xf32> to vector<16x1xf32>
    %cst_3 = arith.constant 1.280000e+02 : f32
    %9 = vector.broadcast %cst_3 : f32 to vector<16x1xf32>
    %10 = arith.divf %8, %9 : vector<16x1xf32>
    %11 = arith.mulf %5, %5 : vector<16x1xf32>
    %12 = arith.subf %10, %11 : vector<16x1xf32>
    %cst_4 = arith.constant 9.99999996E-13 : f32
    %13 = vector.broadcast %cst_4 : f32 to vector<16x1xf32>
    %14 = arith.addf %12, %13 : vector<16x1xf32>
    %15 = math.rsqrt %14 : vector<16x1xf32>
    %16 = vector.broadcast %5 : vector<16x1xf32> to vector<16x128xf32>
    %17 = arith.subf %1, %16 : vector<16x128xf32>
    %18 = vector.broadcast %15 : vector<16x1xf32> to vector<16x128xf32>
    %19 = arith.mulf %17, %18 : vector<16x128xf32>
    %c0_5 = arith.constant 0 : index
    %c0_6 = arith.constant 0 : index
    %20 = vector.load %arg2[%c0_5, %c0_6] : memref<1x128xf32, #tpu.memory_space<vmem>>, vector<1x128xf32>
    %21 = vector.broadcast %20 : vector<1x128xf32> to vector<16x128xf32>
    %22 = arith.mulf %19, %21 : vector<16x128xf32>
    %c0_7 = arith.constant 0 : index
    %c0_8 = arith.constant 0 : index
    %23 = vector.load %arg3[%c0_7, %c0_8] : memref<1x128xf32, #tpu.memory_space<vmem>>, vector<1x128xf32>
    %24 = vector.broadcast %23 : vector<1x128xf32> to vector<16x128xf32>
    %25 = arith.addf %22, %24 : vector<16x128xf32>
    %26 = arith.truncf %25 : vector<16x128xf32> to vector<16x128xbf16>
    %c0_9 = arith.constant 0 : index
    %c0_10 = arith.constant 0 : index
    %27 = vector.load %arg4[%c0_9, %c0_10] : memref<16x128xbf16, #tpu.memory_space<vmem>>, vector<16x128xbf16>
    tpu.vector_store %arg4[%c0_9, %c0_10], %26 {strides = array<i32>} : memref<16x128xbf16, #tpu.memory_space<vmem>>, vector<16x128xbf16>,
    return
  }
  func.func @transform_0(%arg0: i32) -> (i32, i32) {
    %c0_i32 = arith.constant 0 : i32
    %c0_i32_0 = arith.constant 0 : i32
    return %arg0, %c0_i32 : i32, i32
  }
  func.func @transform_1(%arg0: i32) -> (i32, i32) {
    %c0_i32 = arith.constant 0 : i32
    %c0_i32_0 = arith.constant 0 : i32
    %c0_i32_1 = arith.constant 0 : i32
    return %c0_i32, %c0_i32_0 : i32, i32
  }
  func.func @transform_2(%arg0: i32) -> (i32, i32) {
    %c0_i32 = arith.constant 0 : i32
    %c0_i32_0 = arith.constant 0 : i32
    %c0_i32_1 = arith.constant 0 : i32
    return %c0_i32, %c0_i32_0 : i32, i32
  }
  func.func @transform_3(%arg0: i32) -> (i32, i32) {
    %c0_i32 = arith.constant 0 : i32
    %c0_i32_0 = arith.constant 0 : i32
    return %arg0, %c0_i32 : i32, i32
  }
}

</mosaic_0001>

<llo_original>
// kernel: tpu_custom_call.1
$region0: #{tpu_custom_call.1}
  #allocation0 [shape = 'u32[]', space=smem, size = 0x4, offset = 0x4, fixed_abs, tag = 'smem constant byte address 0x4 - core index']
  #allocation1 [shape = 'u32[144,128]{1,0:T(1,128)}', space=vmem, size = 0x12000, scoped, tag = 'internal scratch']
  %s0 = inlined_call_operand.hbm [shape: bf16[16,128], index: 0, kind: input, shape index: {}]
  %s1 = inlined_call_operand.hbm [shape: f32[1,128], index: 1, kind: input, shape index: {}]
  %s2 = inlined_call_operand.hbm [shape: f32[1,128], index: 2, kind: input, shape index: {}]
  %s3 = inlined_call_operand.hbm [shape: bf16[16,128], index: 3, kind: output, shape index: {}]
  %s4 = sld [smem:[#allocation0]]
  $region34: #{tpu_custom_call.1} parent=0
    _
  %s6 = ssub.s32 1, %s4
  %s7 = scalar_select 0, %s6, %s4
  $region1: #{tpu_custom_call.1} parent=0
    #allocation2 [shape = 'u8[4096]{0}', space=vmem, size = 0x1000, scoped, tag = 'input window, operand 0, single buffered']
    #allocation3 [shape = 's32[1]{0}', space=sflag, size = 0x4, scoped, tag = 'scoped memory for tpu_custom_call.1']
    #allocation4 [shape = 's32[1]{0}', space=sflag, size = 0x4, scoped, tag = 'scoped memory for tpu_custom_call.1']
    #allocation5 [shape = 'u8[512]{0}', space=vmem, size = 0x400, scoped, tag = 'input window, operand 1, single buffered']
    #allocation6 [shape = 's32[1]{0}', space=sflag, size = 0x4, scoped, tag = 'scoped memory for tpu_custom_call.1']
    #allocation7 [shape = 'u8[512]{0}', space=vmem, size = 0x400, scoped, tag = 'input window, operand 2, single buffered']
    #allocation8 [shape = 'u8[4096]{0}', space=vmem, size = 0x1000, scoped, tag = 'output window, operand 0, single buffered']
    %8 = vsyncpa [#allocation3], 0
    %9 = vsyncpa [#allocation6], 0
    %10 = vsyncpa [#allocation4], 0
    // Predicated region
    $region2: #{tpu_custom_call.1} parent=1 // pred_check
      _
    $region3: #{tpu_custom_call.1} parent=1 // pred_check_branch
      %12 = sbr.rel (0) target = $region5
    $region4: #{tpu_custom_call.1} parent=1 // pred_region
      %s14 = ssub.s32 128, 128
      %15 = vsyncadd [#allocation3], %s14
      %s16 = sshll.u32 [#allocation2], 4
      %s17 = int_to_ptr.vmem [resolvable:$true] %s16
      %22 = dma.hbm_to_vmem [thread:$0]  %s0, 128, %s17, [#allocation3], 64, 64, 4
    $region5: #{tpu_custom_call.1} parent=1 // pred_fallthru
      _
    // Predicated region
    $region6: #{tpu_custom_call.1} parent=1 // pred_check
      _
    $region7: #{tpu_custom_call.1} parent=1 // pred_check_branch
      %24 = sbr.rel (0) target = $region9
    $region8: #{tpu_custom_call.1} parent=1 // pred_region
      %s26 = ssub.s32 16, 16
      %27 = vsyncadd [#allocation6], %s26
      %s29 = sshll.u32 [#allocation5], 4
      %s30 = int_to_ptr.vmem [resolvable:$true] %s29
      %32 = dma.hbm_to_vmem [thread:$0]  %s1, 16, %s30, [#allocation6]
    $region9: #{tpu_custom_call.1} parent=1 // pred_fallthru
      _
    // Predicated region
    $region10: #{tpu_custom_call.1} parent=1 // pred_check
      _
    $region11: #{tpu_custom_call.1} parent=1 // pred_check_branch
      %34 = sbr.rel (0) target = $region13
    $region12: #{tpu_custom_call.1} parent=1 // pred_region
      %s36 = ssub.s32 16, 16
      %37 = vsyncadd [#allocation6], %s36
      %s39 = sshll.u32 [#allocation7], 4
      %s40 = int_to_ptr.vmem [resolvable:$true] %s39
      %42 = dma.hbm_to_vmem [thread:$0]  %s2, 16, %s40, [#allocation6]
    $region13: #{tpu_custom_call.1} parent=1 // pred_fallthru
      _
    // Predicated region
    $region14: #{tpu_custom_call.1} parent=1 // pred_check
      _
    $region15: #{tpu_custom_call.1} parent=1 // pred_check_branch
      %44 = sbr.rel (0) target = $region17
    $region16: #{tpu_custom_call.1} parent=1 // pred_region
      %45 = dma.done [#allocation3], 128
    $region17: #{tpu_custom_call.1} parent=1 // pred_fallthru
      _
    // Predicated region
    $region18: #{tpu_custom_call.1} parent=1 // pred_check
      _
    $region19: #{tpu_custom_call.1} parent=1 // pred_check_branch
      %47 = sbr.rel (0) target = $region21
    $region20: #{tpu_custom_call.1} parent=1 // pred_region
      %48 = dma.done [#allocation6], 16
    $region21: #{tpu_custom_call.1} parent=1 // pred_fallthru
      _
    // Predicated region
    $region22: #{tpu_custom_call.1} parent=1 // pred_check
      _
    $region23: #{tpu_custom_call.1} parent=1 // pred_check_branch
      %50 = sbr.rel (0) target = $region25
    $region24: #{tpu_custom_call.1} parent=1 // pred_region
      %51 = dma.done [#allocation6], 16
    $region25: #{tpu_custom_call.1} parent=1 // pred_fallthru
      _
    %v52 = vld [vmem:[#allocation2] sm:$0xf]
    %v53 = vld [vmem:[#allocation2 + $0x4] sm:$0xf]
    %v54 = vunpack.c.l.bf16 %v52
    %v55 = vunpack.c.l.bf16 %v53
    %56 = vadd.xlane.f32.xlu0 %v54
    %v57 = vpop.xlane.xlu0 %56
    %58 = vadd.xlane.f32.xlu0 %v55
    %v59 = vpop.xlane.xlu0 %58
    %v60 = vrcp.pop 128.0
    %v61 = vmul.f32 %v57, %v60
    %v62 = vmul.f32 %v59, %v60
    %v63 = vmul.f32 %v54, %v54
    %v64 = vmul.f32 %v55, %v55
    %65 = vadd.xlane.f32.xlu0 %v63
    %v66 = vpop.xlane.xlu0 %65
    %67 = vadd.xlane.f32.xlu0 %v64
    %v68 = vpop.xlane.xlu0 %67
    %v69 = vmul.f32 %v66, %v60
    %v70 = vmul.f32 %v68, %v60
    %v71 = vmul.f32 %v61, %v61
    %v72 = vmul.f32 %v62, %v62
    %v73 = vsub.f32 %v69, %v71
    %v74 = vsub.f32 %v70, %v72
    %v75 = vadd.f32 %v73, 1e-12
    %v76 = vadd.f32 %v74, 1e-12
    %v77 = vrsqrt.pop %v75
    %v78 = vrsqrt.pop %v76
    %v79 = vsub.f32 %v54, %v61
    %v80 = vsub.f32 %v55, %v62
    %v81 = vmul.f32 %v79, %v77
    %v82 = vmul.f32 %v80, %v78
    %v83 = vld [vmem:[#allocation5] sm:$0x1]
    %v85 = vlaneseq
    %v86 = vshrl.u32 %v85, 7
    %v87 = vsub.s32 0, %v86
    %v88 = vrot.slane %v83, %v87
    %v90 = vmul.f32 %v81, %v88
    %v91 = vmul.f32 %v82, %v88
    %v92 = vld [vmem:[#allocation7] sm:$0x1]
    %v94 = vlaneseq
    %v95 = vshrl.u32 %v94, 7
    %v96 = vsub.s32 0, %v95
    %v97 = vrot.slane %v92, %v96
    %v99 = vadd.f32 %v90, %v97
    %v100 = vadd.f32 %v91, %v97
    %v101 = vpack.c.bf16 %v100, %v99
    %v103 = vunpack.c.l.b16 %v101
    %v104 = vunpack.c.h.b16 %v101
    %v105 = vpack.c.b16 %v103, %v103
    %v106 = vpack.c.b16 %v104, %v104
    %109 = vst [vmem:[#allocation8] sm:$0xf] %v105
    %110 = vst [vmem:[#allocation8 + $0x4] sm:$0xf] %v106
    // Predicated region
    $region26: #{tpu_custom_call.1} parent=1 // pred_check
      _
    $region27: #{tpu_custom_call.1} parent=1 // pred_check_branch
      %112 = sbr.rel (0) target = $region29
    $region28: #{tpu_custom_call.1} parent=1 // pred_region
      %s114 = ssub.s32 128, 128
      %115 = vsyncadd [#allocation4], %s114
      %s116 = sshll.u32 [#allocation8], 4
      %s117 = int_to_ptr.vmem [resolvable:$true] %s116
      %122 = dma.vmem_to_hbm [thread:$0]  %s117, 128, %s3, [#allocation4], 64, 64, 4
    $region29: #{tpu_custom_call.1} parent=1 // pred_fallthru
      _
    // Predicated region
    $region30: #{tpu_custom_call.1} parent=1 // pred_check
      _
    $region31: #{tpu_custom_call.1} parent=1 // pred_check_branch
      %124 = sbr.rel (0) target = $region33
    $region32: #{tpu_custom_call.1} parent=1 // pred_region
      %125 = dma.done [#allocation4], 128
    $region33: #{tpu_custom_call.1} parent=1 // pred_fallthru
      _
    %126 = vsyncpa [#allocation3], 1
    %127 = vsyncpa [#allocation6], 1
    %128 = vsyncpa [#allocation4], 1

</llo_original>
